<compile_context>
chip_gen: v5e
topology: v5e:2x2
jax: 0.10.0
libtpu: 0.0.40
codegen_flags: <defaults>
</compile_context>

<pallas_src>
import functools

import jax
import jax.numpy as jnp
from jax import lax
from jax.experimental import pallas as pl
from jax.experimental.pallas import tpu as pltpu

# ----- module hyperparameters (from the PyTorch script) -----
embedding_size = 10
hidden_size = 8
dictionary = ["e", "h", "l", "o"]
num_class = len(dictionary)   # 4
inputs_size = num_class       # 4 (vocab size)
num_layers = 2

# ----- packed weight-slab layout (lane width = hidden_size = 8, f32) -----
# every section starts on a multiple-of-8 row so static ref slices are tile aligned
_VP = 8                       # vocab rows padded 4 -> 8 (extra rows are zero)
IH_OFF = 0                    # (_VP, H)  emb @ Wih0^T + b_ih0 + b_hh0
WHH0_OFF = 8                  # (H, H)    Whh0^T
WIH1_OFF = 16                 # (H, H)    Wih1^T
WHH1_OFF = 24                 # (H, H)    Whh1^T
B1_OFF = 32                   # (1, H)    b_ih1 + b_hh1          (padded to 8 rows)
WFC_OFF = 40                  # (H, C->H) Wfc^T, lanes >= C zero
BFC_OFF = 48                  # (1, C->H) b_fc, lanes >= C zero  (padded to 8 rows)
SLAB_ROWS = 56


def rnn_forward_kernel(idx_ref,     # (S*B, 1) int32 token ids, time-major flat
                       slab_ref,    # (SLAB_ROWS, H) packed f32 weights (layout above)
                       out_ref,     # (B*S, C) logits, batch-major flat
                       h_acc_ref,   # VMEM scratch (B*S, H), batch-major hidden states
                       *, seq_len, batch):
    S, B = seq_len, batch
    H = hidden_size

    # ---- one-time weight loads (static, tile-aligned slices of the slab) ----
    ih_tab = slab_ref[IH_OFF:IH_OFF + _VP, :]            # (8, H)
    whh0_t = slab_ref[WHH0_OFF:WHH0_OFF + H, :]          # (H, H)
    wih1_t = slab_ref[WIH1_OFF:WIH1_OFF + H, :]          # (H, H)
    whh1_t = slab_ref[WHH1_OFF:WHH1_OFF + H, :]          # (H, H)
    b1b = jnp.broadcast_to(slab_ref[B1_OFF:B1_OFF + 1, :], (B, H))   # hoisted broadcast
    wfc_t = slab_ref[WFC_OFF:WFC_OFF + H, :]             # (H, H), cols >= C are zero
    bfc = slab_ref[BFC_OFF:BFC_OFF + 1, :]               # (1, H), cols >= C are zero

    # ---- hoisted, carry-independent work: one gather-matmul for all timesteps ----
    # NOTE: token ids outside [0, V) would yield an all-zero row here (PyTorch's
    # Embedding would raise instead); inputs are assumed valid.
    idx = idx_ref[...]                                                   # (S*B, 1)
    onehot = (idx == lax.broadcasted_iota(jnp.int32, (S * B, _VP), 1)
              ).astype(jnp.float32)                                      # (S*B, 8)
    # includes input projection AND both layer-0 biases
    ih_all = jnp.dot(onehot, ih_tab,
                     preferred_element_type=jnp.float32)                 # (S*B, H)

    # ---- serial recurrence: 3 dots + 2 tanh per step, only 2 dots are dependent ----
    h0 = jnp.zeros((B, H), jnp.float32)
    h1 = jnp.zeros((B, H), jnp.float32)
    for t in range(S):                           # static, fully unrolled
        ih_t = ih_all[t * B:(t + 1) * B, :]      # carry-independent, static slice
        # layer-1 partial from PREVIOUS h1: independent of this step's h0 -> overlaps
        p1 = jnp.dot(h1, whh1_t, preferred_element_type=jnp.float32) + b1b
        h0 = jnp.tanh(ih_t + jnp.dot(h0, whh0_t,
                                     preferred_element_type=jnp.float32))
        h1 = jnp.tanh(p1 + jnp.dot(h0, wih1_t,
                                   preferred_element_type=jnp.float32))
        # batch-major scratch writes: fire-and-forget, off the dependency chain
        for b in range(B):
            h_acc_ref[pl.ds(b * S + t, 1), :] = h1[b:b + 1, :]

    # ---- fc applied once to all timesteps, single (batch-major) output store ----
    h_all = h_acc_ref[...]                                               # (B*S, H)
    logits = jnp.dot(h_all, wfc_t, preferred_element_type=jnp.float32) + bfc
    out_ref[...] = logits[:, 0:num_class]


def init_params(key):
    """Deterministic parameter init mimicking PyTorch's uniform(-1/sqrt(H), 1/sqrt(H))."""
    ks = jax.random.split(key, 16)

    def u(k, shape, bound):
        return jax.random.uniform(k, shape, jnp.float32, -bound, bound)

    kH = 1.0 / jnp.sqrt(hidden_size)
    params = {
        "emb":  jax.random.normal(ks[0], (inputs_size, embedding_size), jnp.float32),
        "wih0": u(ks[1], (hidden_size, embedding_size), kH),
        "whh0": u(ks[2], (hidden_size, hidden_size), kH),
        "bih0": u(ks[3], (hidden_size,), kH),
        "bhh0": u(ks[4], (hidden_size,), kH),
        "wih1": u(ks[5], (hidden_size, hidden_size), kH),
        "whh1": u(ks[6], (hidden_size, hidden_size), kH),
        "bih1": u(ks[7], (hidden_size,), kH),
        "bhh1": u(ks[8], (hidden_size,), kH),
        "wfc":  u(ks[9], (num_class, hidden_size), kH),
        "bfc":  u(ks[10], (num_class,), kH),
    }
    return params


def preprocess_params(params):
    """One-time weight preprocessing (OFF the per-call path): pack everything into a
    single (SLAB_ROWS, H) f32 slab so the kernel needs only one weight DMA."""
    H = hidden_size

    def pad_to(a, rows):
        return jnp.pad(a.astype(jnp.float32),
                       ((0, rows - a.shape[0]), (0, H - a.shape[1])))

    ih_table = params["emb"] @ params["wih0"].T + params["bih0"] + params["bhh0"]  # (V,H)
    b1 = (params["bih1"] + params["bhh1"])[None, :]                                # (1,H)
    slab = jnp.concatenate([
        pad_to(ih_table, _VP),            # rows  0..7
        params["whh0"].T,                 # rows  8..15
        params["wih1"].T,                 # rows 16..23
        params["whh1"].T,                 # rows 24..31
        pad_to(b1, 8),                    # rows 32..39
        pad_to(params["wfc"].T, 8),       # rows 40..47
        pad_to(params["bfc"][None, :], 8) # rows 48..55
    ], axis=0)
    assert slab.shape == (SLAB_ROWS, H)
    return slab


@jax.jit
def my_module_forward(x, slab):
    """x: (B, S) int32 token indices -> (B*S, num_class) float32 logits (batch-major,
    identical ordering to PyTorch's x.view(-1, num_class))."""
    B, S = x.shape

    # time-major flat indices: row t*B + b holds token x[b, t]
    idx = jnp.transpose(x.astype(jnp.int32), (1, 0)).reshape(S * B, 1)

    vmem = pl.BlockSpec(memory_space=pltpu.MemorySpace.VMEM)
    out = pl.pallas_call(
        functools.partial(rnn_forward_kernel, seq_len=S, batch=B),
        out_shape=jax.ShapeDtypeStruct((B * S, num_class), jnp.float32),
        in_specs=[vmem, vmem],
        out_specs=vmem,
        scratch_shapes=[pltpu.VMEM((B * S, hidden_size), jnp.float32)],
    )(idx, slab)
    return out   # already batch-major; no post-kernel transpose/reshape needed


def reference_forward(x, params):
    """Pure-JAX reference of the same PyTorch forward, for correctness checking."""
    B, S = x.shape
    xe = params["emb"][x]                       # (B, S, E)
    h0 = jnp.zeros((B, hidden_size), jnp.float32)
    h1 = jnp.zeros((B, hidden_size), jnp.float32)
    ys = []
    for t in range(S):
        xt = xe[:, t, :]
        h0 = jnp.tanh(xt @ params["wih0"].T + params["bih0"]
                      + h0 @ params["whh0"].T + params["bhh0"])
        h1 = jnp.tanh(h0 @ params["wih1"].T + params["bih1"]
                      + h1 @ params["whh1"].T + params["bhh1"])
        ys.append(h1 @ params["wfc"].T + params["bfc"])
    y = jnp.stack(ys, axis=1)                   # (B, S, C)
    return y.reshape(-1, num_class)


if __name__ == "__main__":
    key = jax.random.PRNGKey(0)
    kp, kx = jax.random.split(key)
    params = init_params(kp)
    slab = preprocess_params(params)            # one-time, off the per-call path

    # small example: batch=2, seq=5 (like "hello"), tokens in [0, num_class)
    x = jax.random.randint(kx, (2, 5), 0, num_class, jnp.int32)

    out = my_module_forward(x, slab)
    out = jax.block_until_ready(out)

    ref = reference_forward(x, params)
    assert out.shape == (2 * 5, num_class)
    assert jnp.allclose(out, ref, atol=1e-5, rtol=1e-5)

    print("KERNEL_OK")
</pallas_src>

<mosaic_0001>
module attributes {stable_mosaic.version = 11 : i64} {
  func.func @rnn_forward_kernel(%arg0: memref<10x1xi32, #tpu.memory_space<vmem>>, %arg1: memref<56x8xf32, #tpu.memory_space<vmem>>, %arg2: memref<10x4xf32, #tpu.memory_space<vmem>>, %arg3: memref<10x8xf32, #tpu.memory_space<vmem>>) attributes {dimension_semantics = [], scalar_prefetch = 0 : i64, scratch_operands = 1 : i64, tpu.core_type = #tpu.core_type<tc>} {
    %c0 = arith.constant 0 : index
    %c0_0 = arith.constant 0 : index
    %0 = vector.load %arg1[%c0, %c0_0] : memref<56x8xf32, #tpu.memory_space<vmem>>, vector<8x8xf32>
    %c8 = arith.constant 8 : index
    %c0_1 = arith.constant 0 : index
    %1 = vector.load %arg1[%c8, %c0_1] : memref<56x8xf32, #tpu.memory_space<vmem>>, vector<8x8xf32>
    %c16 = arith.constant 16 : index
    %c0_2 = arith.constant 0 : index
    %2 = vector.load %arg1[%c16, %c0_2] : memref<56x8xf32, #tpu.memory_space<vmem>>, vector<8x8xf32>
    %c24 = arith.constant 24 : index
    %c0_3 = arith.constant 0 : index
    %3 = vector.load %arg1[%c24, %c0_3] : memref<56x8xf32, #tpu.memory_space<vmem>>, vector<8x8xf32>
    %c32 = arith.constant 32 : index
    %c0_4 = arith.constant 0 : index
    %4 = vector.load %arg1[%c32, %c0_4] : memref<56x8xf32, #tpu.memory_space<vmem>>, vector<1x8xf32>
    %5 = vector.shape_cast %4 : vector<1x8xf32> to vector<1x8xf32>
    %6 = vector.broadcast %5 : vector<1x8xf32> to vector<2x8xf32>
    %c40 = arith.constant 40 : index
    %c0_5 = arith.constant 0 : index
    %7 = vector.load %arg1[%c40, %c0_5] : memref<56x8xf32, #tpu.memory_space<vmem>>, vector<8x8xf32>
    %c48 = arith.constant 48 : index
    %c0_6 = arith.constant 0 : index
    %8 = vector.load %arg1[%c48, %c0_6] : memref<56x8xf32, #tpu.memory_space<vmem>>, vector<1x8xf32>
    %c0_7 = arith.constant 0 : index
    %c0_8 = arith.constant 0 : index
    %9 = vector.load %arg0[%c0_7, %c0_8] : memref<10x1xi32, #tpu.memory_space<vmem>>, vector<10x1xi32>
    %10 = tpu.iota {dimensions = array<i32: 1>} : vector<10x8xi32>
    %11 = vector.broadcast %9 : vector<10x1xi32> to vector<10x8xi32>
    %12 = arith.cmpi eq, %11, %10 : vector<10x8xi32>
    %13 = arith.extui %12 : vector<10x8xi1> to vector<10x8xi32>
    %14 = arith.sitofp %13 : vector<10x8xi32> to vector<10x8xf32>
    %cst = arith.constant dense<0.000000e+00> : vector<10x8xf32>
    %15 = tpu.matmul %14, %0, %cst {dimension_numbers = #tpu.dot_dimension_numbers<[1], [0], [0], [1], [0, 0, 1, 1], [], []>} : vector<10x8xf32>, vector<8x8xf32>, vector<10x8xf32> -> vector<10x8xf32>
    %cst_9 = arith.constant 0.000000e+00 : f32
    %16 = vector.broadcast %cst_9 : f32 to vector<2x8xf32>
    %cst_10 = arith.constant 0.000000e+00 : f32
    %17 = vector.broadcast %cst_10 : f32 to vector<2x8xf32>
    %18 = vector.extract_strided_slice %15 {offsets = [0, 0], sizes = [2, 8], strides = [1, 1]} : vector<10x8xf32> to vector<2x8xf32>
    %cst_11 = arith.constant dense<0.000000e+00> : vector<2x8xf32>
    %19 = tpu.matmul %17, %3, %cst_11 {dimension_numbers = #tpu.dot_dimension_numbers<[1], [0], [0], [1], [0, 0, 1, 1], [], []>} : vector<2x8xf32>, vector<8x8xf32>, vector<2x8xf32> -> vector<2x8xf32>
    %20 = arith.addf %19, %6 : vector<2x8xf32>
    %cst_12 = arith.constant dense<0.000000e+00> : vector<2x8xf32>
    %21 = tpu.matmul %16, %1, %cst_12 {dimension_numbers = #tpu.dot_dimension_numbers<[1], [0], [0], [1], [0, 0, 1, 1], [], []>} : vector<2x8xf32>, vector<8x8xf32>, vector<2x8xf32> -> vector<2x8xf32>
    %22 = arith.addf %18, %21 : vector<2x8xf32>
    %23 = math.tanh %22 : vector<2x8xf32>
    %cst_13 = arith.constant dense<0.000000e+00> : vector<2x8xf32>
    %24 = tpu.matmul %23, %2, %cst_13 {dimension_numbers = #tpu.dot_dimension_numbers<[1], [0], [0], [1], [0, 0, 1, 1], [], []>} : vector<2x8xf32>, vector<8x8xf32>, vector<2x8xf32> -> vector<2x8xf32>
    %25 = arith.addf %20, %24 : vector<2x8xf32>
    %26 = math.tanh %25 : vector<2x8xf32>
    %27 = vector.extract_strided_slice %26 {offsets = [0, 0], sizes = [1, 8], strides = [1, 1]} : vector<2x8xf32> to vector<1x8xf32>
    %c0_14 = arith.constant 0 : index
    %c0_15 = arith.constant 0 : index
    %28 = vector.load %arg3[%c0_14, %c0_15] : memref<10x8xf32, #tpu.memory_space<vmem>>, vector<1x8xf32>
    tpu.vector_store %arg3[%c0_14, %c0_15], %27 {strides = array<i32>} : memref<10x8xf32, #tpu.memory_space<vmem>>, vector<1x8xf32>,
    %29 = vector.extract_strided_slice %26 {offsets = [1, 0], sizes = [1, 8], strides = [1, 1]} : vector<2x8xf32> to vector<1x8xf32>
    %c5 = arith.constant 5 : index
    %c0_16 = arith.constant 0 : index
    %30 = vector.load %arg3[%c5, %c0_16] : memref<10x8xf32, #tpu.memory_space<vmem>>, vector<1x8xf32>
    tpu.vector_store %arg3[%c5, %c0_16], %29 {strides = array<i32>} : memref<10x8xf32, #tpu.memory_space<vmem>>, vector<1x8xf32>,
    %31 = vector.extract_strided_slice %15 {offsets = [2, 0], sizes = [2, 8], strides = [1, 1]} : vector<10x8xf32> to vector<2x8xf32>
    %cst_17 = arith.constant dense<0.000000e+00> : vector<2x8xf32>
    %32 = tpu.matmul %26, %3, %cst_17 {dimension_numbers = #tpu.dot_dimension_numbers<[1], [0], [0], [1], [0, 0, 1, 1], [], []>} : vector<2x8xf32>, vector<8x8xf32>, vector<2x8xf32> -> vector<2x8xf32>
    %33 = arith.addf %32, %6 : vector<2x8xf32>
    %cst_18 = arith.constant dense<0.000000e+00> : vector<2x8xf32>
    %34 = tpu.matmul %23, %1, %cst_18 {dimension_numbers = #tpu.dot_dimension_numbers<[1], [0], [0], [1], [0, 0, 1, 1], [], []>} : vector<2x8xf32>, vector<8x8xf32>, vector<2x8xf32> -> vector<2x8xf32>
    %35 = arith.addf %31, %34 : vector<2x8xf32>
    %36 = math.tanh %35 : vector<2x8xf32>
    %cst_19 = arith.constant dense<0.000000e+00> : vector<2x8xf32>
    %37 = tpu.matmul %36, %2, %cst_19 {dimension_numbers = #tpu.dot_dimension_numbers<[1], [0], [0], [1], [0, 0, 1, 1], [], []>} : vector<2x8xf32>, vector<8x8xf32>, vector<2x8xf32> -> vector<2x8xf32>
    %38 = arith.addf %33, %37 : vector<2x8xf32>
    %39 = math.tanh %38 : vector<2x8xf32>
    %40 = vector.extract_strided_slice %39 {offsets = [0, 0], sizes = [1, 8], strides = [1, 1]} : vector<2x8xf32> to vector<1x8xf32>
    %c1 = arith.constant 1 : index
    %c0_20 = arith.constant 0 : index
    %41 = vector.load %arg3[%c1, %c0_20] : memref<10x8xf32, #tpu.memory_space<vmem>>, vector<1x8xf32>
    tpu.vector_store %arg3[%c1, %c0_20], %40 {strides = array<i32>} : memref<10x8xf32, #tpu.memory_space<vmem>>, vector<1x8xf32>,
    %42 = vector.extract_strided_slice %39 {offsets = [1, 0], sizes = [1, 8], strides = [1, 1]} : vector<2x8xf32> to vector<1x8xf32>
    %c6 = arith.constant 6 : index
    %c0_21 = arith.constant 0 : index
    %43 = vector.load %arg3[%c6, %c0_21] : memref<10x8xf32, #tpu.memory_space<vmem>>, vector<1x8xf32>
    tpu.vector_store %arg3[%c6, %c0_21], %42 {strides = array<i32>} : memref<10x8xf32, #tpu.memory_space<vmem>>, vector<1x8xf32>,
    %44 = vector.extract_strided_slice %15 {offsets = [4, 0], sizes = [2, 8], strides = [1, 1]} : vector<10x8xf32> to vector<2x8xf32>
    %cst_22 = arith.constant dense<0.000000e+00> : vector<2x8xf32>
    %45 = tpu.matmul %39, %3, %cst_22 {dimension_numbers = #tpu.dot_dimension_numbers<[1], [0], [0], [1], [0, 0, 1, 1], [], []>} : vector<2x8xf32>, vector<8x8xf32>, vector<2x8xf32> -> vector<2x8xf32>
    %46 = arith.addf %45, %6 : vector<2x8xf32>
    %cst_23 = arith.constant dense<0.000000e+00> : vector<2x8xf32>
    %47 = tpu.matmul %36, %1, %cst_23 {dimension_numbers = #tpu.dot_dimension_numbers<[1], [0], [0], [1], [0, 0, 1, 1], [], []>} : vector<2x8xf32>, vector<8x8xf32>, vector<2x8xf32> -> vector<2x8xf32>
    %48 = arith.addf %44, %47 : vector<2x8xf32>
    %49 = math.tanh %48 : vector<2x8xf32>
    %cst_24 = arith.constant dense<0.000000e+00> : vector<2x8xf32>
    %50 = tpu.matmul %49, %2, %cst_24 {dimension_numbers = #tpu.dot_dimension_numbers<[1], [0], [0], [1], [0, 0, 1, 1], [], []>} : vector<2x8xf32>, vector<8x8xf32>, vector<2x8xf32> -> vector<2x8xf32>
    %51 = arith.addf %46, %50 : vector<2x8xf32>
    %52 = math.tanh %51 : vector<2x8xf32>
    %53 = vector.extract_strided_slice %52 {offsets = [0, 0], sizes = [1, 8], strides = [1, 1]} : vector<2x8xf32> to vector<1x8xf32>
    %c2 = arith.constant 2 : index
    %c0_25 = arith.constant 0 : index
    %54 = vector.load %arg3[%c2, %c0_25] : memref<10x8xf32, #tpu.memory_space<vmem>>, vector<1x8xf32>
    tpu.vector_store %arg3[%c2, %c0_25], %53 {strides = array<i32>} : memref<10x8xf32, #tpu.memory_space<vmem>>, vector<1x8xf32>,
    %55 = vector.extract_strided_slice %52 {offsets = [1, 0], sizes = [1, 8], strides = [1, 1]} : vector<2x8xf32> to vector<1x8xf32>
    %c7 = arith.constant 7 : index
    %c0_26 = arith.constant 0 : index
    %56 = vector.load %arg3[%c7, %c0_26] : memref<10x8xf32, #tpu.memory_space<vmem>>, vector<1x8xf32>
    tpu.vector_store %arg3[%c7, %c0_26], %55 {strides = array<i32>} : memref<10x8xf32, #tpu.memory_space<vmem>>, vector<1x8xf32>,
    %57 = vector.extract_strided_slice %15 {offsets = [6, 0], sizes = [2, 8], strides = [1, 1]} : vector<10x8xf32> to vector<2x8xf32>
    %cst_27 = arith.constant dense<0.000000e+00> : vector<2x8xf32>
    %58 = tpu.matmul %52, %3, %cst_27 {dimension_numbers = #tpu.dot_dimension_numbers<[1], [0], [0], [1], [0, 0, 1, 1], [], []>} : vector<2x8xf32>, vector<8x8xf32>, vector<2x8xf32> -> vector<2x8xf32>
    %59 = arith.addf %58, %6 : vector<2x8xf32>
    %cst_28 = arith.constant dense<0.000000e+00> : vector<2x8xf32>
    %60 = tpu.matmul %49, %1, %cst_28 {dimension_numbers = #tpu.dot_dimension_numbers<[1], [0], [0], [1], [0, 0, 1, 1], [], []>} : vector<2x8xf32>, vector<8x8xf32>, vector<2x8xf32> -> vector<2x8xf32>
    %61 = arith.addf %57, %60 : vector<2x8xf32>
    %62 = math.tanh %61 : vector<2x8xf32>
    %cst_29 = arith.constant dense<0.000000e+00> : vector<2x8xf32>
    %63 = tpu.matmul %62, %2, %cst_29 {dimension_numbers = #tpu.dot_dimension_numbers<[1], [0], [0], [1], [0, 0, 1, 1], [], []>} : vector<2x8xf32>, vector<8x8xf32>, vector<2x8xf32> -> vector<2x8xf32>
    %64 = arith.addf %59, %63 : vector<2x8xf32>
    %65 = math.tanh %64 : vector<2x8xf32>
    %66 = vector.extract_strided_slice %65 {offsets = [0, 0], sizes = [1, 8], strides = [1, 1]} : vector<2x8xf32> to vector<1x8xf32>
    %c3 = arith.constant 3 : index
    %c0_30 = arith.constant 0 : index
    %67 = vector.load %arg3[%c3, %c0_30] : memref<10x8xf32, #tpu.memory_space<vmem>>, vector<1x8xf32>
    tpu.vector_store %arg3[%c3, %c0_30], %66 {strides = array<i32>} : memref<10x8xf32, #tpu.memory_space<vmem>>, vector<1x8xf32>,
    %68 = vector.extract_strided_slice %65 {offsets = [1, 0], sizes = [1, 8], strides = [1, 1]} : vector<2x8xf32> to vector<1x8xf32>
    %c8_31 = arith.constant 8 : index
    %c0_32 = arith.constant 0 : index
    %69 = vector.load %arg3[%c8_31, %c0_32] : memref<10x8xf32, #tpu.memory_space<vmem>>, vector<1x8xf32>
    tpu.vector_store %arg3[%c8_31, %c0_32], %68 {strides = array<i32>} : memref<10x8xf32, #tpu.memory_space<vmem>>, vector<1x8xf32>,
    %70 = vector.extract_strided_slice %15 {offsets = [8, 0], sizes = [2, 8], strides = [1, 1]} : vector<10x8xf32> to vector<2x8xf32>
    %cst_33 = arith.constant dense<0.000000e+00> : vector<2x8xf32>
    %71 = tpu.matmul %65, %3, %cst_33 {dimension_numbers = #tpu.dot_dimension_numbers<[1], [0], [0], [1], [0, 0, 1, 1], [], []>} : vector<2x8xf32>, vector<8x8xf32>, vector<2x8xf32> -> vector<2x8xf32>
    %72 = arith.addf %71, %6 : vector<2x8xf32>
    %cst_34 = arith.constant dense<0.000000e+00> : vector<2x8xf32>
    %73 = tpu.matmul %62, %1, %cst_34 {dimension_numbers = #tpu.dot_dimension_numbers<[1], [0], [0], [1], [0, 0, 1, 1], [], []>} : vector<2x8xf32>, vector<8x8xf32>, vector<2x8xf32> -> vector<2x8xf32>
    %74 = arith.addf %70, %73 : vector<2x8xf32>
    %75 = math.tanh %74 : vector<2x8xf32>
    %cst_35 = arith.constant dense<0.000000e+00> : vector<2x8xf32>
    %76 = tpu.matmul %75, %2, %cst_35 {dimension_numbers = #tpu.dot_dimension_numbers<[1], [0], [0], [1], [0, 0, 1, 1], [], []>} : vector<2x8xf32>, vector<8x8xf32>, vector<2x8xf32> -> vector<2x8xf32>
    %77 = arith.addf %72, %76 : vector<2x8xf32>
    %78 = math.tanh %77 : vector<2x8xf32>
    %79 = vector.extract_strided_slice %78 {offsets = [0, 0], sizes = [1, 8], strides = [1, 1]} : vector<2x8xf32> to vector<1x8xf32>
    %c4 = arith.constant 4 : index
    %c0_36 = arith.constant 0 : index
    %80 = vector.load %arg3[%c4, %c0_36] : memref<10x8xf32, #tpu.memory_space<vmem>>, vector<1x8xf32>
    tpu.vector_store %arg3[%c4, %c0_36], %79 {strides = array<i32>} : memref<10x8xf32, #tpu.memory_space<vmem>>, vector<1x8xf32>,
    %81 = vector.extract_strided_slice %78 {offsets = [1, 0], sizes = [1, 8], strides = [1, 1]} : vector<2x8xf32> to vector<1x8xf32>
    %c9 = arith.constant 9 : index
    %c0_37 = arith.constant 0 : index
    %82 = vector.load %arg3[%c9, %c0_37] : memref<10x8xf32, #tpu.memory_space<vmem>>, vector<1x8xf32>
    tpu.vector_store %arg3[%c9, %c0_37], %81 {strides = array<i32>} : memref<10x8xf32, #tpu.memory_space<vmem>>, vector<1x8xf32>,
    %c0_38 = arith.constant 0 : index
    %c0_39 = arith.constant 0 : index
    %83 = vector.load %arg3[%c0_38, %c0_39] : memref<10x8xf32, #tpu.memory_space<vmem>>, vector<10x8xf32>
    %cst_40 = arith.constant dense<0.000000e+00> : vector<10x8xf32>
    %84 = tpu.matmul %83, %7, %cst_40 {dimension_numbers = #tpu.dot_dimension_numbers<[1], [0], [0], [1], [0, 0, 1, 1], [], []>} : vector<10x8xf32>, vector<8x8xf32>, vector<10x8xf32> -> vector<10x8xf32>
    %85 = vector.broadcast %8 : vector<1x8xf32> to vector<10x8xf32>
    %86 = arith.addf %84, %85 : vector<10x8xf32>
    %87 = vector.extract_strided_slice %86 {offsets = [0, 0], sizes = [10, 4], strides = [1, 1]} : vector<10x8xf32> to vector<10x4xf32>
    %c0_41 = arith.constant 0 : index
    %c0_42 = arith.constant 0 : index
    %88 = vector.load %arg2[%c0_41, %c0_42] : memref<10x4xf32, #tpu.memory_space<vmem>>, vector<10x4xf32>
    tpu.vector_store %arg2[%c0_41, %c0_42], %87 {strides = array<i32>} : memref<10x4xf32, #tpu.memory_space<vmem>>, vector<10x4xf32>,
    return
  }
}

</mosaic_0001>

<llo_original>
// kernel: my_module_forward.1
$region0: #{my_module_forward.1}
  #allocation0 [shape = 'u32[]', space=smem, size = 0x4, offset = 0x4, fixed_abs, tag = 'smem constant byte address 0x4 - core index']
  #allocation1 [shape = 'u32[72,128]{1,0:T(1,128)}', space=vmem, size = 0x9000, scoped, tag = 'internal scratch']
  #allocation2 [shape = 'f32[10,8]{1,0:T(8,128)}', space=vmem, size = 0x2000, scoped, tag = 'scratch operand']
  %s0 = inlined_call_operand.vmem [shape: s32[10,1], index: 0, kind: input, shape index: {}]
  %s1 = inlined_call_operand.vmem [shape: f32[56,8], index: 1, kind: input, shape index: {}]
  %s2 = inlined_call_operand.vmem [shape: f32[10,4], index: 2, kind: output, shape index: {}]
  %s3 = sld [smem:[#allocation0]]
  $region18: #{my_module_forward.1} parent=0
    _
  %s5 = ssub.s32 1, %s3
  %s6 = scalar_select 0, %s5, %s3
  // Predicated region
  $region2: #{my_module_forward.1} parent=0 // pred_check
    _
  $region3: #{my_module_forward.1} parent=0 // pred_check_branch
    %8 = sbr.rel (0) target = $region5
  $region4: #{my_module_forward.1} parent=0 // pred_region
    _
  $region5: #{my_module_forward.1} parent=0 // pred_fallthru
    _
  // Predicated region
  $region6: #{my_module_forward.1} parent=0 // pred_check
    _
  $region7: #{my_module_forward.1} parent=0 // pred_check_branch
    %10 = sbr.rel (0) target = $region9
  $region8: #{my_module_forward.1} parent=0 // pred_region
    _
  $region9: #{my_module_forward.1} parent=0 // pred_fallthru
    _
  %v11 = vld [vmem:[%s1] sm:$0xff]
  %v12 = vld [vmem:[%s1 + $0x8] sm:$0xff]
  %v13 = vld [vmem:[%s1 + $0x10] sm:$0xff]
  %v14 = vld [vmem:[%s1 + $0x18] sm:$0xff]
  %v15 = vld [vmem:[%s1 + $0x20] sm:$0x1]
  %v16 = vperm.slane %v15, 0
  %v17 = vld [vmem:[%s1 + $0x28] sm:$0xff]
  %v18 = vld [vmem:[%s1 + $0x30] sm:$0x1]
  %v19 = vld [vmem:[%s0] sm:$0xff]
  %v20 = vld [vmem:[%s0 + $0x8] sm:$0x3]
  %v21 = vlaneseq
  %v22 = vand.u32 %v21, 127
  %23 = vset.pattern.permute.xlu0 0
  %24 = vperm.xlu0 %23, %v19
  %v25 = vpop.permute.xlu0 %24
  %26 = vset.pattern.permute.xlu0 0
  %27 = vperm.xlu0 %26, %v20
  %v28 = vpop.permute.xlu0 %27
  %vm29 = vcmp.eq.s32.totalorder %v25, %v22
  %vm30 = vcmp.eq.s32.totalorder %v28, %v22
  %v31 = vsel %vm29, 1, 0
  %v32 = vsel %vm30, 1, 0
  %v33 = vcvt.s32.f32 %v31
  %v34 = vcvt.s32.f32 %v32
  %vm35 = vcmask 64512
  %v37 = vsel %vm35, %v33, 0
  %v40 = vsel %vm35, %v34, 0
  %42 = vmatpush.msra.mxu0 0.0
  %43 = vmatpush.msra.mxu0 0.0
  %44 = vmatpush.msra.mxu0 0.0
  %45 = vmatpush.msra.mxu0 0.0
  %46 = vmatpush.msra.mxu0 0.0
  %47 = vmatpush.msra.mxu0 0.0
  %48 = vmatpush.msra.mxu0 0.0
  %49 = vmatpush.msra.mxu0 0.0
  %50 = vmatpush.msra.mxu0 0.0
  %51 = vmatpush.msra.mxu0 0.0
  %52 = vmatpush.msra.mxu0 0.0
  %53 = vmatpush.msra.mxu0 0.0
  %54 = vmatpush.msra.mxu0 0.0
  %55 = vmatpush.msra.mxu0 0.0
  %56 = vmatpush.msra.mxu0 0.0
  %57 = vmatpush.msra.mxu0 %v11
  %58 = vmatmul.f32.gmra.mxu0 %v37
  %v59 = vpop.f32.mrf.mxu0
  %v60 = vadd.f32 0.0, %v59
  %61 = vmatmul.f32.gmra.mxu0 %v40
  %v62 = vpop.f32.mrf.mxu0
  %v63 = vadd.f32 0.0, %v62
  %64 = vdwg.mxu0
  %v66 = vsel %vm35, 0.0, 0
  %68 = vmatpush.msra.mxu0 0.0
  %69 = vmatpush.msra.mxu0 0.0
  %70 = vmatpush.msra.mxu0 0.0
  %71 = vmatpush.msra.mxu0 0.0
  %72 = vmatpush.msra.mxu0 0.0
  %73 = vmatpush.msra.mxu0 0.0
  %74 = vmatpush.msra.mxu0 0.0
  %75 = vmatpush.msra.mxu0 0.0
  %76 = vmatpush.msra.mxu0 0.0
  %77 = vmatpush.msra.mxu0 0.0
  %78 = vmatpush.msra.mxu0 0.0
  %79 = vmatpush.msra.mxu0 0.0
  %80 = vmatpush.msra.mxu0 0.0
  %81 = vmatpush.msra.mxu0 0.0
  %82 = vmatpush.msra.mxu0 0.0
  %83 = vmatpush.msra.mxu0 %v14
  %84 = vmatmul.f32.gmra.mxu0 %v66
  %v85 = vpop.f32.mrf.mxu0
  %v86 = vadd.f32 %v16, %v85
  %87 = vdwg.mxu0
  %88 = vmatpush.msra.mxu0 0.0
  %89 = vmatpush.msra.mxu0 0.0
  %90 = vmatpush.msra.mxu0 0.0
  %91 = vmatpush.msra.mxu0 0.0
  %92 = vmatpush.msra.mxu0 0.0
  %93 = vmatpush.msra.mxu0 0.0
  %94 = vmatpush.msra.mxu0 0.0
  %95 = vmatpush.msra.mxu0 0.0
  %96 = vmatpush.msra.mxu0 0.0
  %97 = vmatpush.msra.mxu0 0.0
  %98 = vmatpush.msra.mxu0 0.0
  %99 = vmatpush.msra.mxu0 0.0
  %100 = vmatpush.msra.mxu0 0.0
  %101 = vmatpush.msra.mxu0 0.0
  %102 = vmatpush.msra.mxu0 0.0
  %103 = vmatpush.msra.mxu0 %v12
  %104 = vmatmul.f32.gmra.mxu0 %v66
  %v105 = vpop.f32.mrf.mxu0
  %v106 = vadd.f32 0.0, %v105
  %107 = vdwg.mxu0
  %v108 = vadd.f32 %v60, %v106
  %v109 = vtanh.pop %v108
  %v111 = vsel %vm35, %v109, 0
  %113 = vmatpush.msra.mxu0 0.0
  %114 = vmatpush.msra.mxu0 0.0
  %115 = vmatpush.msra.mxu0 0.0
  %116 = vmatpush.msra.mxu0 0.0
  %117 = vmatpush.msra.mxu0 0.0
  %118 = vmatpush.msra.mxu0 0.0
  %119 = vmatpush.msra.mxu0 0.0
  %120 = vmatpush.msra.mxu0 0.0
  %121 = vmatpush.msra.mxu0 0.0
  %122 = vmatpush.msra.mxu0 0.0
  %123 = vmatpush.msra.mxu0 0.0
  %124 = vmatpush.msra.mxu0 0.0
  %125 = vmatpush.msra.mxu0 0.0
  %126 = vmatpush.msra.mxu0 0.0
  %127 = vmatpush.msra.mxu0 0.0
  %128 = vmatpush.msra.mxu0 %v13
  %129 = vmatmul.f32.gmra.mxu0 %v111
  %v130 = vpop.f32.mrf.mxu0
  %v131 = vadd.f32 0.0, %v130
  %132 = vdwg.mxu0
  %v133 = vadd.f32 %v86, %v131
  %v134 = vtanh.pop %v133
  %vm135 = vcmask 57344
  %136 = vst.msk [vmem:[#allocation2] sm:$0x1] %vm135, %v134
  %vm137 = vcmask 58369
  %138 = vst.msk [vmem:[#allocation2 + $0x4] sm:$0x2] %vm137, %v134
  %v140 = vsel %vm35, %v134, 0
  %142 = vmatpush.msra.mxu0 0.0
  %143 = vmatpush.msra.mxu0 0.0
  %144 = vmatpush.msra.mxu0 0.0
  %145 = vmatpush.msra.mxu0 0.0
  %146 = vmatpush.msra.mxu0 0.0
  %147 = vmatpush.msra.mxu0 0.0
  %148 = vmatpush.msra.mxu0 0.0
  %149 = vmatpush.msra.mxu0 0.0
  %150 = vmatpush.msra.mxu0 0.0
  %151 = vmatpush.msra.mxu0 0.0
  %152 = vmatpush.msra.mxu0 0.0
  %153 = vmatpush.msra.mxu0 0.0
  %154 = vmatpush.msra.mxu0 0.0
  %155 = vmatpush.msra.mxu0 0.0
  %156 = vmatpush.msra.mxu0 0.0
  %157 = vmatpush.msra.mxu0 %v14
  %158 = vmatmul.f32.gmra.mxu0 %v140
  %v159 = vpop.f32.mrf.mxu0
  %v160 = vadd.f32 %v16, %v159
  %161 = vdwg.mxu0
  %162 = vmatpush.msra.mxu0 0.0
  %163 = vmatpush.msra.mxu0 0.0
  %164 = vmatpush.msra.mxu0 0.0
  %165 = vmatpush.msra.mxu0 0.0
  %166 = vmatpush.msra.mxu0 0.0
  %167 = vmatpush.msra.mxu0 0.0
  %168 = vmatpush.msra.mxu0 0.0
  %169 = vmatpush.msra.mxu0 0.0
  %170 = vmatpush.msra.mxu0 0.0
  %171 = vmatpush.msra.mxu0 0.0
  %172 = vmatpush.msra.mxu0 0.0
  %173 = vmatpush.msra.mxu0 0.0
  %174 = vmatpush.msra.mxu0 0.0
  %175 = vmatpush.msra.mxu0 0.0
  %176 = vmatpush.msra.mxu0 0.0
  %177 = vmatpush.msra.mxu0 %v12
  %178 = vmatmul.f32.gmra.mxu0 %v111
  %v179 = vpop.f32.mrf.mxu0
  %v180 = vadd.f32 0.0, %v179
  %181 = vdwg.mxu0
  %v183 = vrot.slane %v180, 6
  %v185 = vadd.f32 %v60, %v183
  %v186 = vtanh.pop %v185
  %v188 = vrot.slane %v186, 2
  %v189 = vsel %vm35, %v188, 0
  %191 = vmatpush.msra.mxu0 0.0
  %192 = vmatpush.msra.mxu0 0.0
  %193 = vmatpush.msra.mxu0 0.0
  %194 = vmatpush.msra.mxu0 0.0
  %195 = vmatpush.msra.mxu0 0.0
  %196 = vmatpush.msra.mxu0 0.0
  %197 = vmatpush.msra.mxu0 0.0
  %198 = vmatpush.msra.mxu0 0.0
  %199 = vmatpush.msra.mxu0 0.0
  %200 = vmatpush.msra.mxu0 0.0
  %201 = vmatpush.msra.mxu0 0.0
  %202 = vmatpush.msra.mxu0 0.0
  %203 = vmatpush.msra.mxu0 0.0
  %204 = vmatpush.msra.mxu0 0.0
  %205 = vmatpush.msra.mxu0 0.0
  %206 = vmatpush.msra.mxu0 %v13
  %207 = vmatmul.f32.gmra.mxu0 %v189
  %v208 = vpop.f32.mrf.mxu0
  %v209 = vadd.f32 0.0, %v208
  %210 = vdwg.mxu0
  %v211 = vadd.f32 %v160, %v209
  %v212 = vtanh.pop %v211
  %213 = vst.msk [vmem:[#allocation2 + $0x1] sm:$0x1] %vm135, %v212
  %214 = vst.msk [vmem:[#allocation2 + $0x5] sm:$0x2] %vm137, %v212
  %v216 = vsel %vm35, %v212, 0
  %218 = vmatpush.msra.mxu0 0.0
  %219 = vmatpush.msra.mxu0 0.0
  %220 = vmatpush.msra.mxu0 0.0
  %221 = vmatpush.msra.mxu0 0.0
  %222 = vmatpush.msra.mxu0 0.0
  %223 = vmatpush.msra.mxu0 0.0
  %224 = vmatpush.msra.mxu0 0.0
  %225 = vmatpush.msra.mxu0 0.0
  %226 = vmatpush.msra.mxu0 0.0
  %227 = vmatpush.msra.mxu0 0.0
  %228 = vmatpush.msra.mxu0 0.0
  %229 = vmatpush.msra.mxu0 0.0
  %230 = vmatpush.msra.mxu0 0.0
  %231 = vmatpush.msra.mxu0 0.0
  %232 = vmatpush.msra.mxu0 0.0
  %233 = vmatpush.msra.mxu0 %v14
  %234 = vmatmul.f32.gmra.mxu0 %v216
  %v235 = vpop.f32.mrf.mxu0
  %v236 = vadd.f32 %v16, %v235
  %237 = vdwg.mxu0
  %238 = vmatpush.msra.mxu0 0.0
  %239 = vmatpush.msra.mxu0 0.0
  %240 = vmatpush.msra.mxu0 0.0
  %241 = vmatpush.msra.mxu0 0.0
  %242 = vmatpush.msra.mxu0 0.0
  %243 = vmatpush.msra.mxu0 0.0
  %244 = vmatpush.msra.mxu0 0.0
  %245 = vmatpush.msra.mxu0 0.0
  %246 = vmatpush.msra.mxu0 0.0
  %247 = vmatpush.msra.mxu0 0.0
  %248 = vmatpush.msra.mxu0 0.0
  %249 = vmatpush.msra.mxu0 0.0
  %250 = vmatpush.msra.mxu0 0.0
  %251 = vmatpush.msra.mxu0 0.0
  %252 = vmatpush.msra.mxu0 0.0
  %253 = vmatpush.msra.mxu0 %v12
  %254 = vmatmul.f32.gmra.mxu0 %v189
  %v255 = vpop.f32.mrf.mxu0
  %v256 = vadd.f32 0.0, %v255
  %257 = vdwg.mxu0
  %v259 = vrot.slane %v256, 4
  %v261 = vadd.f32 %v60, %v259
  %v262 = vtanh.pop %v261
  %v264 = vrot.slane %v262, 4
  %v265 = vsel %vm35, %v264, 0
  %267 = vmatpush.msra.mxu0 0.0
  %268 = vmatpush.msra.mxu0 0.0
  %269 = vmatpush.msra.mxu0 0.0
  %270 = vmatpush.msra.mxu0 0.0
  %271 = vmatpush.msra.mxu0 0.0
  %272 = vmatpush.msra.mxu0 0.0
  %273 = vmatpush.msra.mxu0 0.0
  %274 = vmatpush.msra.mxu0 0.0
  %275 = vmatpush.msra.mxu0 0.0
  %276 = vmatpush.msra.mxu0 0.0
  %277 = vmatpush.msra.mxu0 0.0
  %278 = vmatpush.msra.mxu0 0.0
  %279 = vmatpush.msra.mxu0 0.0
  %280 = vmatpush.msra.mxu0 0.0
  %281 = vmatpush.msra.mxu0 0.0
  %282 = vmatpush.msra.mxu0 %v13
  %283 = vmatmul.f32.gmra.mxu0 %v265
  %v284 = vpop.f32.mrf.mxu0
  %v285 = vadd.f32 0.0, %v284
  %286 = vdwg.mxu0
  %v287 = vadd.f32 %v236, %v285
  %v288 = vtanh.pop %v287
  %289 = vst.msk [vmem:[#allocation2 + $0x2] sm:$0x1] %vm135, %v288
  %290 = vst.msk [vmem:[#allocation2 + $0x6] sm:$0x2] %vm137, %v288
  %v292 = vsel %vm35, %v288, 0
  %294 = vmatpush.msra.mxu0 0.0
  %295 = vmatpush.msra.mxu0 0.0
  %296 = vmatpush.msra.mxu0 0.0
  %297 = vmatpush.msra.mxu0 0.0
  %298 = vmatpush.msra.mxu0 0.0
  %299 = vmatpush.msra.mxu0 0.0
  %300 = vmatpush.msra.mxu0 0.0
  %301 = vmatpush.msra.mxu0 0.0
  %302 = vmatpush.msra.mxu0 0.0
  %303 = vmatpush.msra.mxu0 0.0
  %304 = vmatpush.msra.mxu0 0.0
  %305 = vmatpush.msra.mxu0 0.0
  %306 = vmatpush.msra.mxu0 0.0
  %307 = vmatpush.msra.mxu0 0.0
  %308 = vmatpush.msra.mxu0 0.0
  %309 = vmatpush.msra.mxu0 %v14
  %310 = vmatmul.f32.gmra.mxu0 %v292
  %v311 = vpop.f32.mrf.mxu0
  %v312 = vadd.f32 %v16, %v311
  %313 = vdwg.mxu0
  %314 = vmatpush.msra.mxu0 0.0
  %315 = vmatpush.msra.mxu0 0.0
  %316 = vmatpush.msra.mxu0 0.0
  %317 = vmatpush.msra.mxu0 0.0
  %318 = vmatpush.msra.mxu0 0.0
  %319 = vmatpush.msra.mxu0 0.0
  %320 = vmatpush.msra.mxu0 0.0
  %321 = vmatpush.msra.mxu0 0.0
  %322 = vmatpush.msra.mxu0 0.0
  %323 = vmatpush.msra.mxu0 0.0
  %324 = vmatpush.msra.mxu0 0.0
  %325 = vmatpush.msra.mxu0 0.0
  %326 = vmatpush.msra.mxu0 0.0
  %327 = vmatpush.msra.mxu0 0.0
  %328 = vmatpush.msra.mxu0 0.0
  %329 = vmatpush.msra.mxu0 %v12
  %330 = vmatmul.f32.gmra.mxu0 %v265
  %v331 = vpop.f32.mrf.mxu0
  %v332 = vadd.f32 0.0, %v331
  %333 = vdwg.mxu0
  %v335 = vrot.slane %v332, 2
  %v337 = vadd.f32 %v60, %v335
  %v338 = vtanh.pop %v337
  %v340 = vrot.slane %v338, 6
  %v341 = vsel %vm35, %v340, 0
  %343 = vmatpush.msra.mxu0 0.0
  %344 = vmatpush.msra.mxu0 0.0
  %345 = vmatpush.msra.mxu0 0.0
  %346 = vmatpush.msra.mxu0 0.0
  %347 = vmatpush.msra.mxu0 0.0
  %348 = vmatpush.msra.mxu0 0.0
  %349 = vmatpush.msra.mxu0 0.0
  %350 = vmatpush.msra.mxu0 0.0
  %351 = vmatpush.msra.mxu0 0.0
  %352 = vmatpush.msra.mxu0 0.0
  %353 = vmatpush.msra.mxu0 0.0
  %354 = vmatpush.msra.mxu0 0.0
  %355 = vmatpush.msra.mxu0 0.0
  %356 = vmatpush.msra.mxu0 0.0
  %357 = vmatpush.msra.mxu0 0.0
  %358 = vmatpush.msra.mxu0 %v13
  %359 = vmatmul.f32.gmra.mxu0 %v341
  %v360 = vpop.f32.mrf.mxu0
  %v361 = vadd.f32 0.0, %v360
  %362 = vdwg.mxu0
  %v363 = vadd.f32 %v312, %v361
  %v364 = vtanh.pop %v363
  %365 = vst.msk [vmem:[#allocation2 + $0x3] sm:$0x1] %vm135, %v364
  %366 = vst.msk [vmem:[#allocation2 + $0x7] sm:$0x2] %vm137, %v364
  %v368 = vsel %vm35, %v364, 0
  %370 = vmatpush.msra.mxu0 0.0
  %371 = vmatpush.msra.mxu0 0.0
  %372 = vmatpush.msra.mxu0 0.0
  %373 = vmatpush.msra.mxu0 0.0
  %374 = vmatpush.msra.mxu0 0.0
  %375 = vmatpush.msra.mxu0 0.0
  %376 = vmatpush.msra.mxu0 0.0
  %377 = vmatpush.msra.mxu0 0.0
  %378 = vmatpush.msra.mxu0 0.0
  %379 = vmatpush.msra.mxu0 0.0
  %380 = vmatpush.msra.mxu0 0.0
  %381 = vmatpush.msra.mxu0 0.0
  %382 = vmatpush.msra.mxu0 0.0
  %383 = vmatpush.msra.mxu0 0.0
  %384 = vmatpush.msra.mxu0 0.0
  %385 = vmatpush.msra.mxu0 %v14
  %386 = vmatmul.f32.gmra.mxu0 %v368
  %v387 = vpop.f32.mrf.mxu0
  %v388 = vadd.f32 %v16, %v387
  %389 = vdwg.mxu0
  %390 = vmatpush.msra.mxu0 0.0
  %391 = vmatpush.msra.mxu0 0.0
  %392 = vmatpush.msra.mxu0 0.0
  %393 = vmatpush.msra.mxu0 0.0
  %394 = vmatpush.msra.mxu0 0.0
  %395 = vmatpush.msra.mxu0 0.0
  %396 = vmatpush.msra.mxu0 0.0
  %397 = vmatpush.msra.mxu0 0.0
  %398 = vmatpush.msra.mxu0 0.0
  %399 = vmatpush.msra.mxu0 0.0
  %400 = vmatpush.msra.mxu0 0.0
  %401 = vmatpush.msra.mxu0 0.0
  %402 = vmatpush.msra.mxu0 0.0
  %403 = vmatpush.msra.mxu0 0.0
  %404 = vmatpush.msra.mxu0 0.0
  %405 = vmatpush.msra.mxu0 %v12
  %406 = vmatmul.f32.gmra.mxu0 %v341
  %v407 = vpop.f32.mrf.mxu0
  %v408 = vadd.f32 0.0, %v407
  %409 = vdwg.mxu0
  %v410 = vadd.f32 %v63, %v408
  %v411 = vtanh.pop %v410
  %v413 = vsel %vm35, %v411, 0
  %415 = vmatpush.msra.mxu0 0.0
  %416 = vmatpush.msra.mxu0 0.0
  %417 = vmatpush.msra.mxu0 0.0
  %418 = vmatpush.msra.mxu0 0.0
  %419 = vmatpush.msra.mxu0 0.0
  %420 = vmatpush.msra.mxu0 0.0
  %421 = vmatpush.msra.mxu0 0.0
  %422 = vmatpush.msra.mxu0 0.0
  %423 = vmatpush.msra.mxu0 0.0
  %424 = vmatpush.msra.mxu0 0.0
  %425 = vmatpush.msra.mxu0 0.0
  %426 = vmatpush.msra.mxu0 0.0
  %427 = vmatpush.msra.mxu0 0.0
  %428 = vmatpush.msra.mxu0 0.0
  %429 = vmatpush.msra.mxu0 0.0
  %430 = vmatpush.msra.mxu0 %v13
  %431 = vmatmul.f32.gmra.mxu0 %v413
  %v432 = vpop.f32.mrf.mxu0
  %v433 = vadd.f32 0.0, %v432
  %434 = vdwg.mxu0
  %v435 = vadd.f32 %v388, %v433
  %v436 = vtanh.pop %v435
  %437 = vst.msk [vmem:[#allocation2 + $0x4] sm:$0x1] %vm135, %v436
  %438 = vst.msk [vmem:[#allocation2 + $0x8] sm:$0x2] %vm137, %v436
  %v439 = vld [vmem:[#allocation2] sm:$0xff]
  %v440 = vld [vmem:[#allocation2 + $0x8] sm:$0x3]
  %v441 = vperm.slane %v18, 0
  %v443 = vsel %vm35, %v439, 0
  %v446 = vsel %vm35, %v440, 0
  %448 = vmatpush.msra.mxu0 0.0
  %449 = vmatpush.msra.mxu0 0.0
  %450 = vmatpush.msra.mxu0 0.0
  %451 = vmatpush.msra.mxu0 0.0
  %452 = vmatpush.msra.mxu0 0.0
  %453 = vmatpush.msra.mxu0 0.0
  %454 = vmatpush.msra.mxu0 0.0
  %455 = vmatpush.msra.mxu0 0.0
  %456 = vmatpush.msra.mxu0 0.0
  %457 = vmatpush.msra.mxu0 0.0
  %458 = vmatpush.msra.mxu0 0.0
  %459 = vmatpush.msra.mxu0 0.0
  %460 = vmatpush.msra.mxu0 0.0
  %461 = vmatpush.msra.mxu0 0.0
  %462 = vmatpush.msra.mxu0 0.0
  %463 = vmatpush.msra.mxu0 %v17
  %464 = vmatmul.f32.gmra.mxu0 %v443
  %v465 = vpop.f32.mrf.mxu0
  %v466 = vadd.f32 %v441, %v465
  %467 = vmatmul.f32.gmra.mxu0 %v446
  %v468 = vpop.f32.mrf.mxu0
  %v469 = vadd.f32 %v441, %v468
  %470 = vdwg.mxu0
  %vm471 = vcmask 31744
  %472 = vst.msk [vmem:[%s2] sm:$0xff] %vm471, %v466
  %vm473 = vcmask 25600
  %474 = vst.msk [vmem:[%s2 + $0x8] sm:$0x3] %vm473, %v469
  // Predicated region
  $region10: #{my_module_forward.1} parent=0 // pred_check
    _
  $region11: #{my_module_forward.1} parent=0 // pred_check_branch
    %476 = sbr.rel (0) target = $region13
  $region12: #{my_module_forward.1} parent=0 // pred_region
    _
  $region13: #{my_module_forward.1} parent=0 // pred_fallthru
    _
  // Predicated region
  $region14: #{my_module_forward.1} parent=0 // pred_check
    _
  $region15: #{my_module_forward.1} parent=0 // pred_check_branch
    %478 = sbr.rel (0) target = $region17
  $region16: #{my_module_forward.1} parent=0 // pred_region
    _
  $region17: #{my_module_forward.1} parent=0 // pred_fallthru
    _

</llo_original>
